<compile_context>
chip_gen: v7x
topology: tpu7x:2x2x1
jax: 0.10.0
libtpu: 0.0.40
codegen_flags: <defaults>
</compile_context>

<pallas_src>
import jax
import jax.numpy as jnp
from jax import lax
from jax.experimental import pallas as pl
from jax.experimental.pallas import tpu as pltpu


# ------------------------- model hyperparameters -------------------------
IN_DIM = 2
OUT_DIM = 1
DEPTH = 5
HIDDEN_DIM = 50
NUM_MID = DEPTH - 2          # number of hidden-to-hidden layers
TM_MAX = 1024                # batch-tile upper bound (sweep 512/1024/2048)


# ------------------------------- kernel ----------------------------------
def mlp_kernel(x_ref, w_in_ref, b_in_ref, w_mid_ref, b_mid_ref,
               w_out_ref, b_out_ref, o_ref):
    # x_ref:   (TM, IN_DIM) row-major batch tile.  Ragged tail rows may hold
    #          undefined data; each batch row stays in its own lane/column all
    #          the way through (tanh bounds it), and Pallas masks the partial
    #          output store, so it never reaches the result.
    # w_*_ref: PyTorch nn.Linear layout (out_features, in_features).
    # b_*_ref: (out_features, 1) columns -> broadcast along the lane (batch) axis.
    # o_ref:   (OUT_DIM, TM) lane-dense output block.

    # ff_in + tanh: (HID, IN) x (TM, IN)^T -> (HID, TM); batch lands on lanes
    # (NT contraction folds the x transpose into the MXU feed).
    h = lax.dot_general(w_in_ref[...], x_ref[...],
                        dimension_numbers=(((1,), (1,)), ((), ())),
                        preferred_element_type=jnp.float32) + b_in_ref[...]
    h = jnp.tanh(h)

    # (depth - 2) hidden layers, statically unrolled (small fixed count).
    for i in range(NUM_MID):
        h = jnp.tanh(jnp.dot(w_mid_ref[i], h,
                             preferred_element_type=jnp.float32)
                     + b_mid_ref[i])

    # ff_out (no activation): (OUT, HID) @ (HID, TM) -> (OUT, TM).
    # NOTE(perf review): with OUT_DIM=1 this is a nearly-empty MXU pass; a VPU
    # broadcast-multiply + sublane reduction could replace it, but the kernel is
    # overhead/EUP-bound, so keep the dot until a bundle dump shows the MXU
    # result pop on the critical path.
    o_ref[...] = (jnp.dot(w_out_ref[...], h,
                          preferred_element_type=jnp.float32)
                  + b_out_ref[...]).astype(o_ref.dtype)


# --------------------------- tile-size selection ---------------------------
def _pick_tm(n):
    """Largest batch tile <= TM_MAX (multiple of 128), but keep >= 2 grid blocks
    whenever the batch allows it so the "parallel" grid axis can shard across
    v7x's two TensorCores."""
    half = pl.cdiv(n, 2)
    tm = pl.cdiv(half, 128) * 128
    return max(128, min(TM_MAX, tm))


# ------------------------------- wrapper ----------------------------------
@jax.jit
def feedforward(x, w_in, b_in, w_mid, b_mid, w_out, b_out):
    """x: (N, IN_DIM) -> (N, OUT_DIM).  Any N; the last block is ragged and its
    out-of-bounds output columns are masked by Pallas."""
    n = x.shape[0]
    tm = _pick_tm(n)
    n_blocks = pl.cdiv(n, tm)

    out_t = pl.pallas_call(
        mlp_kernel,
        out_shape=jax.ShapeDtypeStruct((OUT_DIM, n), jnp.float32),
        grid_spec=pltpu.PrefetchScalarGridSpec(
            num_scalar_prefetch=0,
            grid=(n_blocks,),
            in_specs=[
                pl.BlockSpec((tm, IN_DIM), lambda i: (i, 0)),                 # x tile
                pl.BlockSpec((HIDDEN_DIM, IN_DIM), lambda i: (0, 0)),         # W_in
                pl.BlockSpec((HIDDEN_DIM, 1), lambda i: (0, 0)),              # b_in
                pl.BlockSpec((NUM_MID, HIDDEN_DIM, HIDDEN_DIM),
                             lambda i: (0, 0, 0)),                            # W_mid stack
                pl.BlockSpec((NUM_MID, HIDDEN_DIM, 1), lambda i: (0, 0, 0)),  # b_mid stack
                pl.BlockSpec((OUT_DIM, HIDDEN_DIM), lambda i: (0, 0)),        # W_out
                pl.BlockSpec((OUT_DIM, 1), lambda i: (0, 0)),                 # b_out
            ],
            out_specs=pl.BlockSpec((OUT_DIM, tm), lambda i: (0, i)),
        ),
        compiler_params=pltpu.CompilerParams(
            dimension_semantics=("parallel",)),
    )(x, w_in, b_in, w_mid, b_mid, w_out, b_out)

    # (1, N) -> (N, 1): element-order preserving, so XLA lowers it as a bitcast.
    return out_t.T


# --------------------------- parameter init --------------------------------
def xavier_normal(key, out_features, in_features, gain=1.0):
    # matches torch.nn.init.xavier_normal_ std; PyTorch (out, in) layout
    std = gain * jnp.sqrt(2.0 / (in_features + out_features))
    return std * jax.random.normal(key, (out_features, in_features),
                                   dtype=jnp.float32)


def init_params(key):
    keys = jax.random.split(key, NUM_MID + 2)
    w_in = xavier_normal(keys[0], HIDDEN_DIM, IN_DIM)
    b_in = jnp.zeros((HIDDEN_DIM, 1), jnp.float32)
    w_mid = jnp.stack([xavier_normal(keys[1 + i], HIDDEN_DIM, HIDDEN_DIM)
                       for i in range(NUM_MID)], axis=0)
    b_mid = jnp.zeros((NUM_MID, HIDDEN_DIM, 1), jnp.float32)
    w_out = xavier_normal(keys[-1], OUT_DIM, HIDDEN_DIM)
    b_out = jnp.zeros((OUT_DIM, 1), jnp.float32)
    return w_in, b_in, w_mid, b_mid, w_out, b_out


def reference(x, w_in, b_in, w_mid, b_mid, w_out, b_out):
    # Plain-JAX reference in the standard (N, features) layout.
    h = jnp.tanh(x @ w_in.T + b_in[:, 0])
    for i in range(NUM_MID):
        h = jnp.tanh(h @ w_mid[i].T + b_mid[i, :, 0])
    return h @ w_out.T + b_out[:, 0]


# --------------------------------- main -------------------------------------
if __name__ == "__main__":
    key = jax.random.PRNGKey(0)
    kx, kp = jax.random.split(key)

    # N=300 -> TM=256, 2-step "parallel" grid (both v7x TCs busy) with a ragged
    # second block (exercises the masked partial-output path).
    N = 300
    x = jax.random.normal(kx, (N, IN_DIM), dtype=jnp.float32)
    params = init_params(kp)

    out = feedforward(x, *params)
    out = jax.block_until_ready(out)

    ref = reference(x, *params)
    assert out.shape == (N, OUT_DIM)
    assert jnp.allclose(out, ref, atol=1e-4, rtol=1e-4)

    print("KERNEL_OK")
</pallas_src>

<mosaic_0001>
module attributes {stable_mosaic.version = 11 : i64} {
  func.func @mlp_kernel(%arg0: i32, %arg1: memref<256x2xf32, #tpu.memory_space<vmem>>, %arg2: memref<50x2xf32, #tpu.memory_space<vmem>>, %arg3: memref<50x1xf32, #tpu.memory_space<vmem>>, %arg4: memref<3x50x50xf32, #tpu.memory_space<vmem>>, %arg5: memref<3x50x1xf32, #tpu.memory_space<vmem>>, %arg6: memref<1x50xf32, #tpu.memory_space<vmem>>, %arg7: memref<1x1xf32, #tpu.memory_space<vmem>>, %arg8: memref<1x256xf32, #tpu.memory_space<vmem>>) attributes {dimension_semantics = [#tpu.dimension_semantics<parallel>], iteration_bounds = array<i64: 2>, scalar_prefetch = 0 : i64, scratch_operands = 0 : i64, tpu.core_type = #tpu.core_type<tc>, window_params = [{transform_indices = @transform_0, window_bounds = array<i64: 256, 2>}, {pipeline_mode = #tpu.pipeline_mode<synchronous>, transform_indices = @transform_1, window_bounds = array<i64: 50, 2>}, {pipeline_mode = #tpu.pipeline_mode<synchronous>, transform_indices = @transform_2, window_bounds = array<i64: 50, 1>}, {pipeline_mode = #tpu.pipeline_mode<synchronous>, transform_indices = @transform_3, window_bounds = array<i64: 3, 50, 50>}, {pipeline_mode = #tpu.pipeline_mode<synchronous>, transform_indices = @transform_4, window_bounds = array<i64: 3, 50, 1>}, {pipeline_mode = #tpu.pipeline_mode<synchronous>, transform_indices = @transform_5, window_bounds = array<i64: 1, 50>}, {pipeline_mode = #tpu.pipeline_mode<synchronous>, transform_indices = @transform_6, window_bounds = array<i64: 1, 1>}, {transform_indices = @transform_7, window_bounds = array<i64: 1, 256>}]} {
    %c0 = arith.constant 0 : index
    %c0_0 = arith.constant 0 : index
    %0 = vector.load %arg2[%c0, %c0_0] : memref<50x2xf32, #tpu.memory_space<vmem>>, vector<50x2xf32>
    %c0_1 = arith.constant 0 : index
    %c0_2 = arith.constant 0 : index
    %1 = vector.load %arg1[%c0_1, %c0_2] : memref<256x2xf32, #tpu.memory_space<vmem>>, vector<256x2xf32>
    %cst = arith.constant dense<0.000000e+00> : vector<50x256xf32>
    %2 = tpu.matmul %0, %1, %cst {dimension_numbers = #tpu.dot_dimension_numbers<[1], [1], [0], [0], [0, 0, 1, 0], [], []>} : vector<50x2xf32>, vector<256x2xf32>, vector<50x256xf32> -> vector<50x256xf32>
    %c0_3 = arith.constant 0 : index
    %c0_4 = arith.constant 0 : index
    %3 = vector.load %arg3[%c0_3, %c0_4] : memref<50x1xf32, #tpu.memory_space<vmem>>, vector<50x1xf32>
    %4 = vector.broadcast %3 : vector<50x1xf32> to vector<50x256xf32>
    %5 = arith.addf %2, %4 : vector<50x256xf32>
    %6 = math.tanh %5 : vector<50x256xf32>
    %c0_5 = arith.constant 0 : index
    %c0_6 = arith.constant 0 : index
    %c0_7 = arith.constant 0 : index
    %7 = vector.load %arg4[%c0_5, %c0_6, %c0_7] : memref<3x50x50xf32, #tpu.memory_space<vmem>>, vector<1x50x50xf32>
    %8 = vector.shape_cast %7 : vector<1x50x50xf32> to vector<50x50xf32>
    %cst_8 = arith.constant dense<0.000000e+00> : vector<50x256xf32>
    %9 = tpu.matmul %8, %6, %cst_8 {dimension_numbers = #tpu.dot_dimension_numbers<[1], [0], [0], [1], [0, 0, 1, 1], [], []>} : vector<50x50xf32>, vector<50x256xf32>, vector<50x256xf32> -> vector<50x256xf32>
    %c0_9 = arith.constant 0 : index
    %c0_10 = arith.constant 0 : index
    %c0_11 = arith.constant 0 : index
    %10 = vector.load %arg5[%c0_9, %c0_10, %c0_11] : memref<3x50x1xf32, #tpu.memory_space<vmem>>, vector<1x50x1xf32>
    %11 = vector.shape_cast %10 : vector<1x50x1xf32> to vector<50x1xf32>
    %12 = vector.broadcast %11 : vector<50x1xf32> to vector<50x256xf32>
    %13 = arith.addf %9, %12 : vector<50x256xf32>
    %14 = math.tanh %13 : vector<50x256xf32>
    %c1 = arith.constant 1 : index
    %c0_12 = arith.constant 0 : index
    %c0_13 = arith.constant 0 : index
    %15 = vector.load %arg4[%c1, %c0_12, %c0_13] : memref<3x50x50xf32, #tpu.memory_space<vmem>>, vector<1x50x50xf32>
    %16 = vector.shape_cast %15 : vector<1x50x50xf32> to vector<50x50xf32>
    %cst_14 = arith.constant dense<0.000000e+00> : vector<50x256xf32>
    %17 = tpu.matmul %16, %14, %cst_14 {dimension_numbers = #tpu.dot_dimension_numbers<[1], [0], [0], [1], [0, 0, 1, 1], [], []>} : vector<50x50xf32>, vector<50x256xf32>, vector<50x256xf32> -> vector<50x256xf32>
    %c1_15 = arith.constant 1 : index
    %c0_16 = arith.constant 0 : index
    %c0_17 = arith.constant 0 : index
    %18 = vector.load %arg5[%c1_15, %c0_16, %c0_17] : memref<3x50x1xf32, #tpu.memory_space<vmem>>, vector<1x50x1xf32>
    %19 = vector.shape_cast %18 : vector<1x50x1xf32> to vector<50x1xf32>
    %20 = vector.broadcast %19 : vector<50x1xf32> to vector<50x256xf32>
    %21 = arith.addf %17, %20 : vector<50x256xf32>
    %22 = math.tanh %21 : vector<50x256xf32>
    %c2 = arith.constant 2 : index
    %c0_18 = arith.constant 0 : index
    %c0_19 = arith.constant 0 : index
    %23 = vector.load %arg4[%c2, %c0_18, %c0_19] : memref<3x50x50xf32, #tpu.memory_space<vmem>>, vector<1x50x50xf32>
    %24 = vector.shape_cast %23 : vector<1x50x50xf32> to vector<50x50xf32>
    %cst_20 = arith.constant dense<0.000000e+00> : vector<50x256xf32>
    %25 = tpu.matmul %24, %22, %cst_20 {dimension_numbers = #tpu.dot_dimension_numbers<[1], [0], [0], [1], [0, 0, 1, 1], [], []>} : vector<50x50xf32>, vector<50x256xf32>, vector<50x256xf32> -> vector<50x256xf32>
    %c2_21 = arith.constant 2 : index
    %c0_22 = arith.constant 0 : index
    %c0_23 = arith.constant 0 : index
    %26 = vector.load %arg5[%c2_21, %c0_22, %c0_23] : memref<3x50x1xf32, #tpu.memory_space<vmem>>, vector<1x50x1xf32>
    %27 = vector.shape_cast %26 : vector<1x50x1xf32> to vector<50x1xf32>
    %28 = vector.broadcast %27 : vector<50x1xf32> to vector<50x256xf32>
    %29 = arith.addf %25, %28 : vector<50x256xf32>
    %30 = math.tanh %29 : vector<50x256xf32>
    %c0_24 = arith.constant 0 : index
    %c0_25 = arith.constant 0 : index
    %31 = vector.load %arg6[%c0_24, %c0_25] : memref<1x50xf32, #tpu.memory_space<vmem>>, vector<1x50xf32>
    %cst_26 = arith.constant dense<0.000000e+00> : vector<1x256xf32>
    %32 = tpu.matmul %31, %30, %cst_26 {dimension_numbers = #tpu.dot_dimension_numbers<[1], [0], [0], [1], [0, 0, 1, 1], [], []>} : vector<1x50xf32>, vector<50x256xf32>, vector<1x256xf32> -> vector<1x256xf32>
    %c0_27 = arith.constant 0 : index
    %c0_28 = arith.constant 0 : index
    %33 = vector.load %arg7[%c0_27, %c0_28] : memref<1x1xf32, #tpu.memory_space<vmem>>, vector<1x1xf32>
    %34 = vector.broadcast %33 : vector<1x1xf32> to vector<1x256xf32>
    %35 = arith.addf %32, %34 : vector<1x256xf32>
    %c0_29 = arith.constant 0 : index
    %c0_30 = arith.constant 0 : index
    %36 = vector.load %arg8[%c0_29, %c0_30] : memref<1x256xf32, #tpu.memory_space<vmem>>, vector<1x256xf32>
    tpu.vector_store %arg8[%c0_29, %c0_30], %35 {strides = array<i32>} : memref<1x256xf32, #tpu.memory_space<vmem>>, vector<1x256xf32>,
    return
  }
  func.func @transform_0(%arg0: i32) -> (i32, i32) {
    %c0_i32 = arith.constant 0 : i32
    %c0_i32_0 = arith.constant 0 : i32
    return %arg0, %c0_i32 : i32, i32
  }
  func.func @transform_1(%arg0: i32) -> (i32, i32) {
    %c0_i32 = arith.constant 0 : i32
    %c0_i32_0 = arith.constant 0 : i32
    %c0_i32_1 = arith.constant 0 : i32
    return %c0_i32, %c0_i32_0 : i32, i32
  }
  func.func @transform_2(%arg0: i32) -> (i32, i32) {
    %c0_i32 = arith.constant 0 : i32
    %c0_i32_0 = arith.constant 0 : i32
    %c0_i32_1 = arith.constant 0 : i32
    return %c0_i32, %c0_i32_0 : i32, i32
  }
  func.func @transform_3(%arg0: i32) -> (i32, i32, i32) {
    %c0_i32 = arith.constant 0 : i32
    %c0_i32_0 = arith.constant 0 : i32
    %c0_i32_1 = arith.constant 0 : i32
    %c0_i32_2 = arith.constant 0 : i32
    return %c0_i32, %c0_i32_0, %c0_i32_1 : i32, i32, i32
  }
  func.func @transform_4(%arg0: i32) -> (i32, i32, i32) {
    %c0_i32 = arith.constant 0 : i32
    %c0_i32_0 = arith.constant 0 : i32
    %c0_i32_1 = arith.constant 0 : i32
    %c0_i32_2 = arith.constant 0 : i32
    return %c0_i32, %c0_i32_0, %c0_i32_1 : i32, i32, i32
  }
  func.func @transform_5(%arg0: i32) -> (i32, i32) {
    %c0_i32 = arith.constant 0 : i32
    %c0_i32_0 = arith.constant 0 : i32
    %c0_i32_1 = arith.constant 0 : i32
    return %c0_i32, %c0_i32_0 : i32, i32
  }
  func.func @transform_6(%arg0: i32) -> (i32, i32) {
    %c0_i32 = arith.constant 0 : i32
    %c0_i32_0 = arith.constant 0 : i32
    %c0_i32_1 = arith.constant 0 : i32
    return %c0_i32, %c0_i32_0 : i32, i32
  }
  func.func @transform_7(%arg0: i32) -> (i32, i32) {
    %c0_i32 = arith.constant 0 : i32
    %c0_i32_0 = arith.constant 0 : i32
    return %c0_i32, %arg0 : i32, i32
  }
}

</mosaic_0001>

<llo_original>
// kernel: feedforward.1
$region0: #{feedforward.1}
  #allocation0 [shape = 'u32[]', space=smem, size = 0x4, offset = 0x4, fixed_abs, tag = 'smem constant byte address 0x4 - core index']
  #allocation1 [shape = 'u32[144,128]{1,0:T(1,128)}', space=vmem, size = 0x12000, scoped, tag = 'internal scratch']
  #allocation2 [shape = 'f32[1,1]{1,0:T(1,128)S(1)}', space=vmem, size = 0x200, scoped, tag = 'scoped memory for feedforward.1']
  %s0 = inlined_call_operand.vmem [shape: f32[300,2], index: 0, kind: input, shape index: {}]
  %s1 = inlined_call_operand.vmem [shape: f32[50,2], index: 1, kind: input, shape index: {}]
  %s2 = inlined_call_operand.vmem [shape: f32[50,1], index: 2, kind: input, shape index: {}]
  %s3 = inlined_call_operand.vmem [shape: f32[3,50,50], index: 3, kind: input, shape index: {}]
  %s4 = inlined_call_operand.vmem [shape: f32[3,50,1], index: 4, kind: input, shape index: {}]
  %s5 = inlined_call_operand.vmem [shape: f32[1,50], index: 5, kind: input, shape index: {}]
  %s6 = inlined_call_operand.<no memory space> [shape: f32[1,1], index: 6, kind: input, shape index: {}]
  %s7 = inlined_call_operand.hbm [shape: f32[1,300], index: 7, kind: output, shape index: {}]
  %s8 = sld [smem:[#allocation0]]
  $region61: #{feedforward.1} parent=0
    _
  %s10 = ssub.s32 1, %s8
  %s11 = scalar_select 0, %s10, %s8
  %v12 = vstv %s6
  %13 = vst [vmem:[#allocation2] sm:$0x1] %v12
  $region1: #{feedforward.1} parent=0
    #allocation3 [shape = 'u8[2048]{0}', space=vmem, size = 0x800, scoped, tag = 'output window, operand 0']
    #allocation4 [shape = 's32[2]{0}', space=sflag, size = 0x8, scoped, tag = 'scoped memory for feedforward.1']
    %14 = vsyncpa [#allocation4], 0
    %s15 = scalar_lea.sflag [#allocation4], 1
    %16 = vsyncpa %s15, 0
    loop: start=0, step=1, limit=4
    $region2: #{feedforward.1} parent=1 // loop_pre_header
      _
    $region3: #{feedforward.1} parent=1 // loop_header
      %s18 = sphi 0, %s22
      %p19 = scmp.ge.s32.totalorder %s18, 4
      %s28 = sphi 0, %s30
      %s31 = sphi 0, %s28
      %s32 = sphi 0, %s31
      %s48 = sphi 0, %s32
      %s52 = sphi 0, %s52
      %s54 = sphi 0, %s52
      %s55 = sphi 0, %s54
      %s69 = sphi 0, %s55
      %s73 = sphi 0, %s73
      %s75 = sphi 0, %s73
      %s76 = sphi 0, %s75
      %s90 = sphi 0, %s76
      %s94 = sphi 0, %s94
      %s96 = sphi 0, %s94
      %s97 = sphi 0, %s96
      %s111 = sphi 0, %s97
      %s115 = sphi 0, %s115
      %s117 = sphi 0, %s115
      %s118 = sphi 0, %s117
      %s132 = sphi 0, %s118
      %s136 = sphi 0, %s136
      %s138 = sphi 0, %s136
      %s139 = sphi 0, %s138
      %s153 = sphi 0, %s139
      %s157 = sphi 0, %s157
      %s159 = sphi 0, %s157
      %s160 = sphi 0, %s159
      %s174 = sphi 0, %s160
      %s180 = sphi 0, %s182
      %s183 = sphi 0, %s180
      %s184 = sphi 0, %s183
      %s200 = sphi 0, %s184
    $region4: #{feedforward.1} parent=1 // loop_header_branch
      %21 = sbr.rel (%p19) target = $region8
    $region5: #{feedforward.1} parent=1 // loop_body
      %s23 = ssub.s32 %s18, 1
      %s24 = ssub.s32 %s18, 2
      %s25 = sadd.s32 %s18, 1
      %s26 = ssub.s32 %s18, %s25
      %p27 = scmp.eq.s32.totalorder %s26, 0
      %s29 = sadd.s32 %s28, 1
      %s30 = scalar_select %p27, %s28, %s29
      %p33 = pneg %p27
      %p34 = scmp.eq.s32.totalorder %s18, 1
      %p35 = por %p33, %p34
      %p36 = scmp.ne.s32.totalorder %s28, %s31
      %p37 = scmp.eq.s32.totalorder %s18, 0
      %p38 = por %p36, %p37
      %p39 = scmp.ne.s32.totalorder %s28, %s31
      %p40 = scmp.eq.s32.totalorder %s23, 1
      %p41 = por %p39, %p40
      %p42 = scmp.ne.s32.totalorder %s31, %s32
      %p43 = scmp.eq.s32.totalorder %s23, 0
      %p44 = por %p42, %p43
      %p45 = scmp.ne.s32.totalorder %s31, %s32
      %p46 = scmp.eq.s32.totalorder %s24, 1
      %p47 = por %p45, %p46
      %p49 = scmp.ne.s32.totalorder %s32, %s48
      %p50 = scmp.eq.s32.totalorder %s24, 0
      %p51 = por %p49, %p50
      %s53 = sadd.s32 %s52, 1
      %p56 = scmp.eq.s32.totalorder %s18, 1
      %p57 = scmp.ne.s32.totalorder %s52, %s54
      %p58 = scmp.eq.s32.totalorder %s18, 0
      %p59 = por %p57, %p58
      %p60 = scmp.ne.s32.totalorder %s52, %s54
      %p61 = scmp.eq.s32.totalorder %s23, 1
      %p62 = por %p60, %p61
      %p63 = scmp.ne.s32.totalorder %s54, %s55
      %p64 = scmp.eq.s32.totalorder %s23, 0
      %p65 = por %p63, %p64
      %p66 = scmp.ne.s32.totalorder %s54, %s55
      %p67 = scmp.eq.s32.totalorder %s24, 1
      %p68 = por %p66, %p67
      %p70 = scmp.ne.s32.totalorder %s55, %s69
      %p71 = scmp.eq.s32.totalorder %s24, 0
      %p72 = por %p70, %p71
      %s74 = sadd.s32 %s73, 1
      %p77 = scmp.eq.s32.totalorder %s18, 1
      %p78 = scmp.ne.s32.totalorder %s73, %s75
      %p79 = scmp.eq.s32.totalorder %s18, 0
      %p80 = por %p78, %p79
      %p81 = scmp.ne.s32.totalorder %s73, %s75
      %p82 = scmp.eq.s32.totalorder %s23, 1
      %p83 = por %p81, %p82
      %p84 = scmp.ne.s32.totalorder %s75, %s76
      %p85 = scmp.eq.s32.totalorder %s23, 0
      %p86 = por %p84, %p85
      %p87 = scmp.ne.s32.totalorder %s75, %s76
      %p88 = scmp.eq.s32.totalorder %s24, 1
      %p89 = por %p87, %p88
      %p91 = scmp.ne.s32.totalorder %s76, %s90
      %p92 = scmp.eq.s32.totalorder %s24, 0
      %p93 = por %p91, %p92
      %s95 = sadd.s32 %s94, 1
      %p98 = scmp.eq.s32.totalorder %s18, 1
      %p99 = scmp.ne.s32.totalorder %s94, %s96
      %p100 = scmp.eq.s32.totalorder %s18, 0
      %p101 = por %p99, %p100
      %p102 = scmp.ne.s32.totalorder %s94, %s96
      %p103 = scmp.eq.s32.totalorder %s23, 1
      %p104 = por %p102, %p103
      %p105 = scmp.ne.s32.totalorder %s96, %s97
      %p106 = scmp.eq.s32.totalorder %s23, 0
      %p107 = por %p105, %p106
      %p108 = scmp.ne.s32.totalorder %s96, %s97
      %p109 = scmp.eq.s32.totalorder %s24, 1
      %p110 = por %p108, %p109
      %p112 = scmp.ne.s32.totalorder %s97, %s111
      %p113 = scmp.eq.s32.totalorder %s24, 0
      %p114 = por %p112, %p113
      %s116 = sadd.s32 %s115, 1
      %p119 = scmp.eq.s32.totalorder %s18, 1
      %p120 = scmp.ne.s32.totalorder %s115, %s117
      %p121 = scmp.eq.s32.totalorder %s18, 0
      %p122 = por %p120, %p121
      %p123 = scmp.ne.s32.totalorder %s115, %s117
      %p124 = scmp.eq.s32.totalorder %s23, 1
      %p125 = por %p123, %p124
      %p126 = scmp.ne.s32.totalorder %s117, %s118
      %p127 = scmp.eq.s32.totalorder %s23, 0
      %p128 = por %p126, %p127
      %p129 = scmp.ne.s32.totalorder %s117, %s118
      %p130 = scmp.eq.s32.totalorder %s24, 1
      %p131 = por %p129, %p130
      %p133 = scmp.ne.s32.totalorder %s118, %s132
      %p134 = scmp.eq.s32.totalorder %s24, 0
      %p135 = por %p133, %p134
      %s137 = sadd.s32 %s136, 1
      %p140 = scmp.eq.s32.totalorder %s18, 1
      %p141 = scmp.ne.s32.totalorder %s136, %s138
      %p142 = scmp.eq.s32.totalorder %s18, 0
      %p143 = por %p141, %p142
      %p144 = scmp.ne.s32.totalorder %s136, %s138
      %p145 = scmp.eq.s32.totalorder %s23, 1
      %p146 = por %p144, %p145
      %p147 = scmp.ne.s32.totalorder %s138, %s139
      %p148 = scmp.eq.s32.totalorder %s23, 0
      %p149 = por %p147, %p148
      %p150 = scmp.ne.s32.totalorder %s138, %s139
      %p151 = scmp.eq.s32.totalorder %s24, 1
      %p152 = por %p150, %p151
      %p154 = scmp.ne.s32.totalorder %s139, %s153
      %p155 = scmp.eq.s32.totalorder %s24, 0
      %p156 = por %p154, %p155
      %s158 = sadd.s32 %s157, 1
      %p161 = scmp.eq.s32.totalorder %s18, 1
      %p162 = scmp.ne.s32.totalorder %s157, %s159
      %p163 = scmp.eq.s32.totalorder %s18, 0
      %p164 = por %p162, %p163
      %p165 = scmp.ne.s32.totalorder %s157, %s159
      %p166 = scmp.eq.s32.totalorder %s23, 1
      %p167 = por %p165, %p166
      %p168 = scmp.ne.s32.totalorder %s159, %s160
      %p169 = scmp.eq.s32.totalorder %s23, 0
      %p170 = por %p168, %p169
      %p171 = scmp.ne.s32.totalorder %s159, %s160
      %p172 = scmp.eq.s32.totalorder %s24, 1
      %p173 = por %p171, %p172
      %p175 = scmp.ne.s32.totalorder %s160, %s174
      %p176 = scmp.eq.s32.totalorder %s24, 0
      %p177 = por %p175, %p176
      %s178 = ssub.s32 %s18, %s25
      %p179 = scmp.eq.s32.totalorder %s178, 0
      %s181 = sadd.s32 %s180, 1
      %s182 = scalar_select %p179, %s180, %s181
      %p185 = pneg %p179
      %p186 = scmp.eq.s32.totalorder %s18, 1
      %p187 = por %p185, %p186
      %p188 = scmp.ne.s32.totalorder %s180, %s183
      %p189 = scmp.eq.s32.totalorder %s18, 0
      %p190 = por %p188, %p189
      %p191 = scmp.ne.s32.totalorder %s180, %s183
      %p192 = scmp.eq.s32.totalorder %s23, 1
      %p193 = por %p191, %p192
      %p194 = scmp.ne.s32.totalorder %s183, %s184
      %p195 = scmp.eq.s32.totalorder %s23, 0
      %p196 = por %p194, %p195
      %p197 = scmp.ne.s32.totalorder %s183, %s184
      %p198 = scmp.eq.s32.totalorder %s24, 1
      %p199 = por %p197, %p198
      %p201 = scmp.ne.s32.totalorder %s184, %s200
      %p202 = scmp.eq.s32.totalorder %s24, 0
      %p203 = por %p201, %p202
      %p204 = scmp.le.s32.totalorder 1, %s18
      %p205 = scmp.lt.s32.totalorder %s18, 3
      %p206 = pnand %p204, %p205
      %p207 = pneg %p206
      // Predicated region
      $region9: #{feedforward.1} parent=5 // pred_check
        _
      $region10: #{feedforward.1} parent=5 // pred_check_branch
        %209 = sbr.rel (%p206) target = $region12
      $region11: #{feedforward.1} parent=5 // pred_region
        %s210 = ssub.s32 %s18, 1
        // Predicated region
        $region13: #{feedforward.1} parent=11 // pred_check
          %p211 = pneg %p65
        $region14: #{feedforward.1} parent=11 // pred_check_branch
          %213 = sbr.rel (%p211) target = $region16
        $region15: #{feedforward.1} parent=11 // pred_region
          _
        $region16: #{feedforward.1} parent=11 // pred_fallthru
          _
        // Predicated region
        $region17: #{feedforward.1} parent=11 // pred_check
          %p214 = pneg %p86
        $region18: #{feedforward.1} parent=11 // pred_check_branch
          %216 = sbr.rel (%p214) target = $region20
        $region19: #{feedforward.1} parent=11 // pred_region
          _
        $region20: #{feedforward.1} parent=11 // pred_fallthru
          _
        // Predicated region
        $region21: #{feedforward.1} parent=11 // pred_check
          %p217 = pneg %p107
        $region22: #{feedforward.1} parent=11 // pred_check_branch
          %219 = sbr.rel (%p217) target = $region24
        $region23: #{feedforward.1} parent=11 // pred_region
          _
        $region24: #{feedforward.1} parent=11 // pred_fallthru
          _
        // Predicated region
        $region25: #{feedforward.1} parent=11 // pred_check
          %p220 = pneg %p128
        $region26: #{feedforward.1} parent=11 // pred_check_branch
          %222 = sbr.rel (%p220) target = $region28
        $region27: #{feedforward.1} parent=11 // pred_region
          _
        $region28: #{feedforward.1} parent=11 // pred_fallthru
          _
        // Predicated region
        $region29: #{feedforward.1} parent=11 // pred_check
          %p223 = pneg %p149
        $region30: #{feedforward.1} parent=11 // pred_check_branch
          %225 = sbr.rel (%p223) target = $region32
        $region31: #{feedforward.1} parent=11 // pred_region
          _
        $region32: #{feedforward.1} parent=11 // pred_fallthru
          _
        // Predicated region
        $region33: #{feedforward.1} parent=11 // pred_check
          %p226 = pneg %p170
        $region34: #{feedforward.1} parent=11 // pred_check_branch
          %228 = sbr.rel (%p226) target = $region36
        $region35: #{feedforward.1} parent=11 // pred_region
          _
        $region36: #{feedforward.1} parent=11 // pred_fallthru
          _
      $region12: #{feedforward.1} parent=5 // pred_fallthru
        _
      %p229 = scmp.lt.s32.totalorder %s18, 2
      // Predicated region
      $region37: #{feedforward.1} parent=5 // pred_check
        %p230 = pneg %p229
      $region38: #{feedforward.1} parent=5 // pred_check_branch
        %232 = sbr.rel (%p230) target = $region40
      $region39: #{feedforward.1} parent=5 // pred_region
        // Predicated region
        $region41: #{feedforward.1} parent=39 // pred_check
          %p233 = pneg %p38
        $region42: #{feedforward.1} parent=39 // pred_check_branch
          %235 = sbr.rel (%p233) target = $region44
        $region43: #{feedforward.1} parent=39 // pred_region
          %s236 = smul.u32 32, %s18
          %s237 = ssub.s32 38, %s236
          %p238 = scmp.lt.s32.totalorder %s237, 32
          %s239 = scalar_select %p238, %s237, 32
          %s240 = smul.u32 128, %s239
          %p241 = scmp.lt.s32.totalorder %s236, 37
          %s242 = scalar_select %p241, %s236, 37
          %s243 = smul.addr %s242, 8
          %s244 = scalar_lea.vmem %s0, %s243
          %s245 = smul.u32 32, %s18
          %s246 = ssub.s32 38, %s245
          %p247 = scmp.lt.s32.totalorder %s246, 32
          %s248 = scalar_select %p247, %s246, 32
          %s249 = smul.u32 128, %s248
        $region44: #{feedforward.1} parent=39 // pred_fallthru
          _
      $region40: #{feedforward.1} parent=5 // pred_fallthru
        _
      %p250 = scmp.le.s32.totalorder 1, %s18
      %p251 = scmp.lt.s32.totalorder %s18, 3
      %p252 = pnand %p250, %p251
      %p253 = pneg %p252
      // Predicated region
      $region45: #{feedforward.1} parent=5 // pred_check
        _
      $region46: #{feedforward.1} parent=5 // pred_check_branch
        %255 = sbr.rel (%p252) target = $region48
      $region47: #{feedforward.1} parent=5 // pred_region
        %s256 = ssub.s32 %s18, 1
        %s257 = smul.u32 32, %s23
        %s258 = ssub.s32 38, %s257
        %p259 = scmp.lt.s32.totalorder %s258, 32
        %s260 = scalar_select %p259, %s258, 32
        %s261 = smul.u32 128, %s260
        %p262 = scmp.lt.s32.totalorder %s257, 37
        %s263 = scalar_select %p262, %s257, 37
        %s264 = smul.addr %s263, 8
        %s265 = scalar_lea.vmem %s0, %s264
        %p266 = pneg %p44
        %p267 = pneg %p41
        %p268 = pneg %p65
        %p269 = pneg %p62
        %p270 = pneg %p86
        %p271 = pneg %p83
        %p272 = pneg %p107
        %p273 = pneg %p104
        %p274 = pneg %p128
        %p275 = pneg %p125
        %p276 = pneg %p149
        %p277 = pneg %p146
        %p278 = pneg %p170
        %p279 = pneg %p167
        %p280 = pneg %p196
        %p281 = pneg %p193
        %s282 = sand.u32 %s183, 1
        %s283 = scalar_lea.sflag [#allocation4], %s282
        %s284 = sand.u32 %s183, 1
        %s285 = smul.addr %s284, 2
        %s286 = scalar_lea.vmem [#allocation3], %s285
        %s287 = smul.u32 32, %s23
        %s288 = ssub.s32 38, %s287
        %p289 = scmp.lt.s32.totalorder %s288, 32
        %s290 = scalar_select %p289, %s288, 32
        %s291 = smul.u32 128, %s290
        %p292 = scmp.lt.s32.totalorder %s287, 37
        %s293 = scalar_select %p292, %s287, 37
        %s294 = smul.addr %s293, 8
        %s295 = scalar_lea.vmem %s0, %s294
        %s296 = smul.u32 32, %s23
        %s297 = ssub.s32 38, %s296
        %p298 = scmp.lt.s32.totalorder %s297, 32
        %s299 = scalar_select %p298, %s297, 32
        %s300 = smul.u32 128, %s299
        %s301 = smul.u32 2, %s23
        %s302 = ssub.s32 3, %s301
        %p303 = scmp.lt.s32.totalorder %s302, 2
        %s304 = scalar_select %p303, %s302, 2
        %s305 = smul.u32 16, %s304
        %v306 = vld [vmem:[%s1] sm:$0xff]
        %v307 = vld [vmem:[%s1 + $0x8] sm:$0xff]
        %v308 = vld [vmem:[%s1 + $0x10] sm:$0xff]
        %v309 = vld [vmem:[%s1 + $0x18] sm:$0xff]
        %v310 = vld [vmem:[%s1 + $0x20] sm:$0xff]
        %v311 = vld [vmem:[%s1 + $0x28] sm:$0xff]
        %v312 = vld [vmem:[%s1 + $0x30] sm:$0x3]
        %v313 = vld [vmem:[%s295] sm:$0xff]
        %v314 = vld [vmem:[%s295 + $0x8] sm:$0xff]
        %v315 = vld [vmem:[%s295 + $0x10] sm:$0xff]
        %v316 = vld [vmem:[%s295 + $0x18] sm:$0xff]
        %v317 = vld [vmem:[%s295 + $0x20] sm:$0xff]
        %v318 = vld [vmem:[%s295 + $0x28] sm:$0xff]
        %v319 = vld [vmem:[%s295 + $0x30] sm:$0xff]
        %v320 = vld [vmem:[%s295 + $0x38] sm:$0xff]
        %v321 = vld [vmem:[%s295 + $0x40] sm:$0xff]
        %v322 = vld [vmem:[%s295 + $0x48] sm:$0xff]
        %v323 = vld [vmem:[%s295 + $0x50] sm:$0xff]
        %v324 = vld [vmem:[%s295 + $0x58] sm:$0xff]
        %v325 = vld [vmem:[%s295 + $0x60] sm:$0xff]
        %v326 = vld [vmem:[%s295 + $0x68] sm:$0xff]
        %v327 = vld [vmem:[%s295 + $0x70] sm:$0xff]
        %v328 = vld [vmem:[%s295 + $0x78] sm:$0xff]
        %v329 = vld [vmem:[%s295 + $0x80] sm:$0xff]
        %v330 = vld [vmem:[%s295 + $0x88] sm:$0xff]
        %v331 = vld [vmem:[%s295 + $0x90] sm:$0xff]
        %v332 = vld [vmem:[%s295 + $0x98] sm:$0xff]
        %v333 = vld [vmem:[%s295 + $0xa0] sm:$0xff]
        %v334 = vld [vmem:[%s295 + $0xa8] sm:$0xff]
        %v335 = vld [vmem:[%s295 + $0xb0] sm:$0xff]
        %v336 = vld [vmem:[%s295 + $0xb8] sm:$0xff]
        %v337 = vld [vmem:[%s295 + $0xc0] sm:$0xff]
        %v338 = vld [vmem:[%s295 + $0xc8] sm:$0xff]
        %v339 = vld [vmem:[%s295 + $0xd0] sm:$0xff]
        %v340 = vld [vmem:[%s295 + $0xd8] sm:$0xff]
        %v341 = vld [vmem:[%s295 + $0xe0] sm:$0xff]
        %v342 = vld [vmem:[%s295 + $0xe8] sm:$0xff]
        %v343 = vld [vmem:[%s295 + $0xf0] sm:$0xff]
        %v344 = vld [vmem:[%s295 + $0xf8] sm:$0xff]
        %v345 = vld [vmem:[%s2] sm:$0xff]
        %v346 = vld [vmem:[%s2 + $0x8] sm:$0xff]
        %v347 = vld [vmem:[%s2 + $0x10] sm:$0xff]
        %v348 = vld [vmem:[%s2 + $0x18] sm:$0xff]
        %v349 = vld [vmem:[%s2 + $0x20] sm:$0xff]
        %v350 = vld [vmem:[%s2 + $0x28] sm:$0xff]
        %v351 = vld [vmem:[%s2 + $0x30] sm:$0x3]
        %353 = vset.pattern.permute.xlu0 0
        %354 = vperm.xlu0 %353, %v345
        %v355 = vpop.permute.xlu0 %354
        %358 = vset.pattern.permute.xlu0 0
        %359 = vperm.xlu0 %358, %v346
        %v360 = vpop.permute.xlu0 %359
        %363 = vset.pattern.permute.xlu0 0
        %364 = vperm.xlu0 %363, %v347
        %v365 = vpop.permute.xlu0 %364
        %368 = vset.pattern.permute.xlu0 0
        %369 = vperm.xlu0 %368, %v348
        %v370 = vpop.permute.xlu0 %369
        %373 = vset.pattern.permute.xlu0 0
        %374 = vperm.xlu0 %373, %v349
        %v375 = vpop.permute.xlu0 %374
        %378 = vset.pattern.permute.xlu0 0
        %379 = vperm.xlu0 %378, %v350
        %v380 = vpop.permute.xlu0 %379
        %383 = vset.pattern.permute.xlu0 0
        %384 = vperm.xlu0 %383, %v351
        %v385 = vpop.permute.xlu0 %384
        %vm387 = vcmask 15360
        %v389 = vsel %vm387, %v306, 0
        %v392 = vsel %vm387, %v307, 0
        %v395 = vsel %vm387, %v308, 0
        %v398 = vsel %vm387, %v309, 0
        %v401 = vsel %vm387, %v310, 0
        %v404 = vsel %vm387, %v311, 0
        %v407 = vsel %vm387, %v312, 0
        %v410 = vsel %vm387, %v313, 0
        %v413 = vsel %vm387, %v314, 0
        %v416 = vsel %vm387, %v315, 0
        %v419 = vsel %vm387, %v316, 0
        %v422 = vsel %vm387, %v317, 0
        %v425 = vsel %vm387, %v318, 0
        %v428 = vsel %vm387, %v319, 0
        %v431 = vsel %vm387, %v320, 0
        %v434 = vsel %vm387, %v321, 0
        %v437 = vsel %vm387, %v322, 0
        %v440 = vsel %vm387, %v323, 0
        %v443 = vsel %vm387, %v324, 0
        %v446 = vsel %vm387, %v325, 0
        %v449 = vsel %vm387, %v326, 0
        %v452 = vsel %vm387, %v327, 0
        %v455 = vsel %vm387, %v328, 0
        %v458 = vsel %vm387, %v329, 0
        %v461 = vsel %vm387, %v330, 0
        %v464 = vsel %vm387, %v331, 0
        %v467 = vsel %vm387, %v332, 0
        %v470 = vsel %vm387, %v333, 0
        %v473 = vsel %vm387, %v334, 0
        %v476 = vsel %vm387, %v335, 0
        %v479 = vsel %vm387, %v336, 0
        %v482 = vsel %vm387, %v337, 0
        %v485 = vsel %vm387, %v338, 0
        %v488 = vsel %vm387, %v339, 0
        %v491 = vsel %vm387, %v340, 0
        %v494 = vsel %vm387, %v341, 0
        %v497 = vsel %vm387, %v342, 0
        %v500 = vsel %vm387, %v343, 0
        %v503 = vsel %vm387, %v344, 0
        %505 = vmatprep.subr.mxu0 0.0
        %506 = vmatpush1.xpose.msra.mxu0 %v410
        %507 = vmatprep.subr.mxu0 0.0
        %508 = vmatpush1.xpose.msra.mxu0 %v413
        %509 = vmatprep.subr.mxu0 0.0
        %510 = vmatpush1.xpose.msra.mxu0 %v416
        %511 = vmatprep.subr.mxu0 0.0
        %512 = vmatpush1.xpose.msra.mxu0 %v419
        %513 = vmatprep.subr.mxu0 0.0
        %514 = vmatpush1.xpose.msra.mxu0 %v422
        %515 = vmatprep.subr.mxu0 0.0
        %516 = vmatpush1.xpose.msra.mxu0 %v425
        %517 = vmatprep.subr.mxu0 0.0
        %518 = vmatpush1.xpose.msra.mxu0 %v428
        %519 = vmatprep.subr.mxu0 0.0
        %520 = vmatpush1.xpose.msra.mxu0 %v431
        %521 = vmatprep.subr.mxu0 0.0
        %522 = vmatpush1.xpose.msra.mxu0 %v434
        %523 = vmatprep.subr.mxu0 0.0
        %524 = vmatpush1.xpose.msra.mxu0 %v437
        %525 = vmatprep.subr.mxu0 0.0
        %526 = vmatpush1.xpose.msra.mxu0 %v440
        %527 = vmatprep.subr.mxu0 0.0
        %528 = vmatpush1.xpose.msra.mxu0 %v443
        %529 = vmatprep.subr.mxu0 0.0
        %530 = vmatpush1.xpose.msra.mxu0 %v446
        %531 = vmatprep.subr.mxu0 0.0
        %532 = vmatpush1.xpose.msra.mxu0 %v449
        %533 = vmatprep.subr.mxu0 0.0
        %534 = vmatpush1.xpose.msra.mxu0 %v452
        %535 = vmatprep.subr.mxu0 0.0
        %536 = vmatpush1.xpose.msra.mxu0 %v455
        %537 = vmatprep.subr.mxu0 0.0
        %538 = vmatpush1.xpose.msra.mxu0 %v458
        %539 = vmatprep.subr.mxu0 0.0
        %540 = vmatpush1.xpose.msra.mxu0 %v461
        %541 = vmatprep.subr.mxu0 0.0
        %542 = vmatpush1.xpose.msra.mxu0 %v464
        %543 = vmatprep.subr.mxu0 0.0
        %544 = vmatpush1.xpose.msra.mxu0 %v467
        %545 = vmatprep.subr.mxu0 0.0
        %546 = vmatpush1.xpose.msra.mxu0 %v470
        %547 = vmatprep.subr.mxu0 0.0
        %548 = vmatpush1.xpose.msra.mxu0 %v473
        %549 = vmatprep.subr.mxu0 0.0
        %550 = vmatpush1.xpose.msra.mxu0 %v476
        %551 = vmatprep.subr.mxu0 0.0
        %552 = vmatpush1.xpose.msra.mxu0 %v479
        %553 = vmatprep.subr.mxu0 0.0
        %554 = vmatpush1.xpose.msra.mxu0 %v482
        %555 = vmatprep.subr.mxu0 0.0
        %556 = vmatpush1.xpose.msra.mxu0 %v485
        %557 = vmatprep.subr.mxu0 0.0
        %558 = vmatpush1.xpose.msra.mxu0 %v488
        %559 = vmatprep.subr.mxu0 0.0
        %560 = vmatpush1.xpose.msra.mxu0 %v491
        %561 = vmatprep.subr.mxu0 0.0
        %562 = vmatpush1.xpose.msra.mxu0 %v494
        %563 = vmatprep.subr.mxu0 0.0
        %564 = vmatpush1.xpose.msra.mxu0 %v497
        %565 = vmatprep.subr.mxu0 0.0
        %566 = vmatpush1.xpose.msra.mxu0 %v500
        %567 = vmatprep.subr.mxu0 0.0
        %568 = vmatpush1.xpose.msra.mxu0 %v503
        %569 = vmatprep.mubr.f32.mxu0 0.0
        %570 = vmatmul.mubr.f32.gmra.mrb[0].mxu0 %v389
        %v571 = vpop.f32.mrb[0].mxu0
        %v572 = vadd.f32 %v355, %v571
        %v573 = vpop.f32.mrb[0].mxu0
        %v574 = vadd.f32 %v355, %v573
        %575 = vmatprep.mubr.f32.mxu0 0.0
        %576 = vmatmul.mubr.f32.gmra.mrb[0].mxu0 %v392
        %v577 = vpop.f32.mrb[0].mxu0
        %v578 = vadd.f32 %v360, %v577
        %v579 = vpop.f32.mrb[0].mxu0
        %v580 = vadd.f32 %v360, %v579
        %581 = vmatprep.mubr.f32.mxu0 0.0
        %582 = vmatmul.mubr.f32.gmra.mrb[0].mxu0 %v395
        %v583 = vpop.f32.mrb[0].mxu0
        %v584 = vadd.f32 %v365, %v583
        %v585 = vpop.f32.mrb[0].mxu0
        %v586 = vadd.f32 %v365, %v585
        %587 = vmatprep.mubr.f32.mxu0 0.0
        %588 = vmatmul.mubr.f32.gmra.mrb[0].mxu0 %v398
        %v589 = vpop.f32.mrb[0].mxu0
        %v590 = vadd.f32 %v370, %v589
        %v591 = vpop.f32.mrb[0].mxu0
        %v592 = vadd.f32 %v370, %v591
        %593 = vmatprep.mubr.f32.mxu0 0.0
        %594 = vmatmul.mubr.f32.gmra.mrb[0].mxu0 %v401
        %v595 = vpop.f32.mrb[0].mxu0
        %v596 = vadd.f32 %v375, %v595
        %v597 = vpop.f32.mrb[0].mxu0
        %v598 = vadd.f32 %v375, %v597
        %599 = vmatprep.mubr.f32.mxu0 0.0
        %600 = vmatmul.mubr.f32.gmra.mrb[0].mxu0 %v404
        %v601 = vpop.f32.mrb[0].mxu0
        %v602 = vadd.f32 %v380, %v601
        %v603 = vpop.f32.mrb[0].mxu0
        %v604 = vadd.f32 %v380, %v603
        %605 = vmatprep.mubr.f32.mxu0 0.0
        %606 = vmatmul.mubr.f32.gmra.mrb[0].mxu0 %v407
        %v607 = vpop.f32.mrb[0].mxu0
        %v608 = vadd.f32 %v385, %v607
        %v609 = vpop.f32.mrb[0].mxu0
        %v610 = vadd.f32 %v385, %v609
        %611 = vdwg.mxu0
        %v612 = vtanh.pop %v572
        %v613 = vtanh.pop %v574
        %v614 = vtanh.pop %v578
        %v615 = vtanh.pop %v580
        %v616 = vtanh.pop %v584
        %v617 = vtanh.pop %v586
        %v618 = vtanh.pop %v590
        %v619 = vtanh.pop %v592
        %v620 = vtanh.pop %v596
        %v621 = vtanh.pop %v598
        %v622 = vtanh.pop %v602
        %v623 = vtanh.pop %v604
        %v624 = vtanh.pop %v608
        %v625 = vtanh.pop %v610
        %v626 = vld [vmem:[%s3] sm:$0xff]
        %v627 = vld [vmem:[%s3 + $0x8] sm:$0xff]
        %v628 = vld [vmem:[%s3 + $0x10] sm:$0xff]
        %v629 = vld [vmem:[%s3 + $0x18] sm:$0xff]
        %v630 = vld [vmem:[%s3 + $0x20] sm:$0xff]
        %v631 = vld [vmem:[%s3 + $0x28] sm:$0xff]
        %v632 = vld [vmem:[%s3 + $0x30] sm:$0x3]
        %v633 = vld [vmem:[%s4] sm:$0xff]
        %v634 = vld [vmem:[%s4 + $0x8] sm:$0xff]
        %v635 = vld [vmem:[%s4 + $0x10] sm:$0xff]
        %v636 = vld [vmem:[%s4 + $0x18] sm:$0xff]
        %v637 = vld [vmem:[%s4 + $0x20] sm:$0xff]
        %v638 = vld [vmem:[%s4 + $0x28] sm:$0xff]
        %v639 = vld [vmem:[%s4 + $0x30] sm:$0x3]
        %641 = vset.pattern.permute.xlu0 0
        %642 = vperm.xlu0 %641, %v633
        %v643 = vpop.permute.xlu0 %642
        %646 = vset.pattern.permute.xlu0 0
        %647 = vperm.xlu0 %646, %v634
        %v648 = vpop.permute.xlu0 %647
        %651 = vset.pattern.permute.xlu0 0
        %652 = vperm.xlu0 %651, %v635
        %v653 = vpop.permute.xlu0 %652
        %656 = vset.pattern.permute.xlu0 0
        %657 = vperm.xlu0 %656, %v636
        %v658 = vpop.permute.xlu0 %657
        %661 = vset.pattern.permute.xlu0 0
        %662 = vperm.xlu0 %661, %v637
        %v663 = vpop.permute.xlu0 %662
        %666 = vset.pattern.permute.xlu0 0
        %667 = vperm.xlu0 %666, %v638
        %v668 = vpop.permute.xlu0 %667
        %671 = vset.pattern.permute.xlu0 0
        %672 = vperm.xlu0 %671, %v639
        %v673 = vpop.permute.xlu0 %672
        %vm675 = vcmask 408576
        %v677 = vsel %vm675, %v626, 0
        %v680 = vsel %vm675, %v627, 0
        %v683 = vsel %vm675, %v628, 0
        %v686 = vsel %vm675, %v629, 0
        %v689 = vsel %vm675, %v630, 0
        %v692 = vsel %vm675, %v631, 0
        %v695 = vsel %vm675, %v632, 0
        %vm697 = vcmask 1041408
        %v699 = vsel %vm697, %v624, 0
        %v702 = vsel %vm697, %v625, 0
        %704 = vmatprep.subr.mxu0 %v613
        %705 = vmatpush1.msra.mxu0 %v612
        %706 = vmatprep.subr.mxu0 %v615
        %707 = vmatpush1.msra.mxu0 %v614
        %708 = vmatprep.subr.mxu0 %v617
        %709 = vmatpush1.msra.mxu0 %v616
        %710 = vmatprep.subr.mxu0 %v619
        %711 = vmatpush1.msra.mxu0 %v618
        %712 = vmatprep.subr.mxu0 %v621
        %713 = vmatpush1.msra.mxu0 %v620
        %714 = vmatprep.subr.mxu0 %v623
        %715 = vmatpush1.msra.mxu0 %v622
        %716 = vmatprep.subr.mxu0 %v702
        %717 = vmatpush1.msra.mxu0 %v699
        %718 = vmatprep.subr.mxu0 0.0
        %719 = vmatpush1.msra.mxu0 0.0
        %720 = vmatprep.subr.mxu0 0.0
        %721 = vmatpush1.msra.mxu0 0.0
        %722 = vmatprep.subr.mxu0 0.0
        %723 = vmatpush1.msra.mxu0 0.0
        %724 = vmatprep.subr.mxu0 0.0
        %725 = vmatpush1.msra.mxu0 0.0
        %726 = vmatprep.subr.mxu0 0.0
        %727 = vmatpush1.msra.mxu0 0.0
        %728 = vmatprep.subr.mxu0 0.0
        %729 = vmatpush1.msra.mxu0 0.0
        %730 = vmatprep.subr.mxu0 0.0
        %731 = vmatpush1.msra.mxu0 0.0
        %732 = vmatprep.subr.mxu0 0.0
        %733 = vmatpush1.msra.mxu0 0.0
        %734 = vmatprep.subr.mxu0 0.0
        %735 = vmatpush1.msra.mxu0 0.0
        %736 = vmatprep.subr.mxu0 0.0
        %737 = vmatpush1.msra.mxu0 0.0
        %738 = vmatprep.subr.mxu0 0.0
        %739 = vmatpush1.msra.mxu0 0.0
        %740 = vmatprep.subr.mxu0 0.0
        %741 = vmatpush1.msra.mxu0 0.0
        %742 = vmatprep.subr.mxu0 0.0
        %743 = vmatpush1.msra.mxu0 0.0
        %744 = vmatprep.subr.mxu0 0.0
        %745 = vmatpush1.msra.mxu0 0.0
        %746 = vmatprep.subr.mxu0 0.0
        %747 = vmatpush1.msra.mxu0 0.0
        %748 = vmatprep.subr.mxu0 0.0
        %749 = vmatpush1.msra.mxu0 0.0
        %750 = vmatprep.subr.mxu0 0.0
        %751 = vmatpush1.msra.mxu0 0.0
        %752 = vmatprep.subr.mxu0 0.0
        %753 = vmatpush1.msra.mxu0 0.0
        %754 = vmatprep.subr.mxu0 0.0
        %755 = vmatpush1.msra.mxu0 0.0
        %756 = vmatprep.subr.mxu0 0.0
        %757 = vmatpush1.msra.mxu0 0.0
        %758 = vmatprep.subr.mxu0 0.0
        %759 = vmatpush1.msra.mxu0 0.0
        %760 = vmatprep.subr.mxu0 0.0
        %761 = vmatpush1.msra.mxu0 0.0
        %762 = vmatprep.subr.mxu0 0.0
        %763 = vmatpush1.msra.mxu0 0.0
        %764 = vmatprep.subr.mxu0 0.0
        %765 = vmatpush1.msra.mxu0 0.0
        %766 = vmatprep.subr.mxu0 0.0
        %767 = vmatpush1.msra.mxu0 0.0
        %768 = vmatprep.mubr.f32.mxu0 0.0
        %769 = vmatmul.mubr.f32.gmra.mrb[0].mxu0 %v677
        %v770 = vpop.f32.mrb[0].mxu0
        %v771 = vadd.f32 %v643, %v770
        %v772 = vpop.f32.mrb[0].mxu0
        %v773 = vadd.f32 %v643, %v772
        %774 = vmatprep.mubr.f32.mxu0 0.0
        %775 = vmatmul.mubr.f32.gmra.mrb[0].mxu0 %v680
        %v776 = vpop.f32.mrb[0].mxu0
        %v777 = vadd.f32 %v648, %v776
        %v778 = vpop.f32.mrb[0].mxu0
        %v779 = vadd.f32 %v648, %v778
        %780 = vmatprep.mubr.f32.mxu0 0.0
        %781 = vmatmul.mubr.f32.gmra.mrb[0].mxu0 %v683
        %v782 = vpop.f32.mrb[0].mxu0
        %v783 = vadd.f32 %v653, %v782
        %v784 = vpop.f32.mrb[0].mxu0
        %v785 = vadd.f32 %v653, %v784
        %786 = vmatprep.mubr.f32.mxu0 0.0
        %787 = vmatmul.mubr.f32.gmra.mrb[0].mxu0 %v686
        %v788 = vpop.f32.mrb[0].mxu0
        %v789 = vadd.f32 %v658, %v788
        %v790 = vpop.f32.mrb[0].mxu0
        %v791 = vadd.f32 %v658, %v790
        %792 = vmatprep.mubr.f32.mxu0 0.0
        %793 = vmatmul.mubr.f32.gmra.mrb[0].mxu0 %v689
        %v794 = vpop.f32.mrb[0].mxu0
        %v795 = vadd.f32 %v663, %v794
        %v796 = vpop.f32.mrb[0].mxu0
        %v797 = vadd.f32 %v663, %v796
        %798 = vmatprep.mubr.f32.mxu0 0.0
        %799 = vmatmul.mubr.f32.gmra.mrb[0].mxu0 %v692
        %v800 = vpop.f32.mrb[0].mxu0
        %v801 = vadd.f32 %v668, %v800
        %v802 = vpop.f32.mrb[0].mxu0
        %v803 = vadd.f32 %v668, %v802
        %804 = vmatprep.mubr.f32.mxu0 0.0
        %805 = vmatmul.mubr.f32.gmra.mrb[0].mxu0 %v695
        %v806 = vpop.f32.mrb[0].mxu0
        %v807 = vadd.f32 %v673, %v806
        %v808 = vpop.f32.mrb[0].mxu0
        %v809 = vadd.f32 %v673, %v808
        %810 = vdwg.mxu0
        %v811 = vtanh.pop %v771
        %v812 = vtanh.pop %v773
        %v813 = vtanh.pop %v777
        %v814 = vtanh.pop %v779
        %v815 = vtanh.pop %v783
        %v816 = vtanh.pop %v785
        %v817 = vtanh.pop %v789
        %v818 = vtanh.pop %v791
        %v819 = vtanh.pop %v795
        %v820 = vtanh.pop %v797
        %v821 = vtanh.pop %v801
        %v822 = vtanh.pop %v803
        %v823 = vtanh.pop %v807
        %v824 = vtanh.pop %v809
        %s825 = scalar_lea.vmem %s3, 56
        %v826 = vld [vmem:[%s825] sm:$0xff]
        %v827 = vld [vmem:[%s825 + $0x8] sm:$0xff]
        %v828 = vld [vmem:[%s825 + $0x10] sm:$0xff]
        %v829 = vld [vmem:[%s825 + $0x18] sm:$0xff]
        %v830 = vld [vmem:[%s825 + $0x20] sm:$0xff]
        %v831 = vld [vmem:[%s825 + $0x28] sm:$0xff]
        %v832 = vld [vmem:[%s825 + $0x30] sm:$0x3]
        %s833 = scalar_lea.vmem %s4, 56
        %v834 = vld [vmem:[%s833] sm:$0xff]
        %v835 = vld [vmem:[%s833 + $0x8] sm:$0xff]
        %v836 = vld [vmem:[%s833 + $0x10] sm:$0xff]
        %v837 = vld [vmem:[%s833 + $0x18] sm:$0xff]
        %v838 = vld [vmem:[%s833 + $0x20] sm:$0xff]
        %v839 = vld [vmem:[%s833 + $0x28] sm:$0xff]
        %v840 = vld [vmem:[%s833 + $0x30] sm:$0x3]
        %842 = vset.pattern.permute.xlu0 0
        %843 = vperm.xlu0 %842, %v834
        %v844 = vpop.permute.xlu0 %843
        %847 = vset.pattern.permute.xlu0 0
        %848 = vperm.xlu0 %847, %v835
        %v849 = vpop.permute.xlu0 %848
        %852 = vset.pattern.permute.xlu0 0
        %853 = vperm.xlu0 %852, %v836
        %v854 = vpop.permute.xlu0 %853
        %857 = vset.pattern.permute.xlu0 0
        %858 = vperm.xlu0 %857, %v837
        %v859 = vpop.permute.xlu0 %858
        %862 = vset.pattern.permute.xlu0 0
        %863 = vperm.xlu0 %862, %v838
        %v864 = vpop.permute.xlu0 %863
        %867 = vset.pattern.permute.xlu0 0
        %868 = vperm.xlu0 %867, %v839
        %v869 = vpop.permute.xlu0 %868
        %872 = vset.pattern.permute.xlu0 0
        %873 = vperm.xlu0 %872, %v840
        %v874 = vpop.permute.xlu0 %873
        %v877 = vsel %vm675, %v826, 0
        %v880 = vsel %vm675, %v827, 0
        %v883 = vsel %vm675, %v828, 0
        %v886 = vsel %vm675, %v829, 0
        %v889 = vsel %vm675, %v830, 0
        %v892 = vsel %vm675, %v831, 0
        %v895 = vsel %vm675, %v832, 0
        %v898 = vsel %vm697, %v823, 0
        %v901 = vsel %vm697, %v824, 0
        %903 = vmatprep.subr.mxu0 %v812
        %904 = vmatpush1.msra.mxu0 %v811
        %905 = vmatprep.subr.mxu0 %v814
        %906 = vmatpush1.msra.mxu0 %v813
        %907 = vmatprep.subr.mxu0 %v816
        %908 = vmatpush1.msra.mxu0 %v815
        %909 = vmatprep.subr.mxu0 %v818
        %910 = vmatpush1.msra.mxu0 %v817
        %911 = vmatprep.subr.mxu0 %v820
        %912 = vmatpush1.msra.mxu0 %v819
        %913 = vmatprep.subr.mxu0 %v822
        %914 = vmatpush1.msra.mxu0 %v821
        %915 = vmatprep.subr.mxu0 %v901
        %916 = vmatpush1.msra.mxu0 %v898
        %917 = vmatprep.subr.mxu0 0.0
        %918 = vmatpush1.msra.mxu0 0.0
        %919 = vmatprep.subr.mxu0 0.0
        %920 = vmatpush1.msra.mxu0 0.0
        %921 = vmatprep.subr.mxu0 0.0
        %922 = vmatpush1.msra.mxu0 0.0
        %923 = vmatprep.subr.mxu0 0.0
        %924 = vmatpush1.msra.mxu0 0.0
        %925 = vmatprep.subr.mxu0 0.0
        %926 = vmatpush1.msra.mxu0 0.0
        %927 = vmatprep.subr.mxu0 0.0
        %928 = vmatpush1.msra.mxu0 0.0
        %929 = vmatprep.subr.mxu0 0.0
        %930 = vmatpush1.msra.mxu0 0.0
        %931 = vmatprep.subr.mxu0 0.0
        %932 = vmatpush1.msra.mxu0 0.0
        %933 = vmatprep.subr.mxu0 0.0
        %934 = vmatpush1.msra.mxu0 0.0
        %935 = vmatprep.subr.mxu0 0.0
        %936 = vmatpush1.msra.mxu0 0.0
        %937 = vmatprep.subr.mxu0 0.0
        %938 = vmatpush1.msra.mxu0 0.0
        %939 = vmatprep.subr.mxu0 0.0
        %940 = vmatpush1.msra.mxu0 0.0
        %941 = vmatprep.subr.mxu0 0.0
        %942 = vmatpush1.msra.mxu0 0.0
        %943 = vmatprep.subr.mxu0 0.0
        %944 = vmatpush1.msra.mxu0 0.0
        %945 = vmatprep.subr.mxu0 0.0
        %946 = vmatpush1.msra.mxu0 0.0
        %947 = vmatprep.subr.mxu0 0.0
        %948 = vmatpush1.msra.mxu0 0.0
        %949 = vmatprep.subr.mxu0 0.0
        %950 = vmatpush1.msra.mxu0 0.0
        %951 = vmatprep.subr.mxu0 0.0
        %952 = vmatpush1.msra.mxu0 0.0
        %953 = vmatprep.subr.mxu0 0.0
        %954 = vmatpush1.msra.mxu0 0.0
        %955 = vmatprep.subr.mxu0 0.0
        %956 = vmatpush1.msra.mxu0 0.0
        %957 = vmatprep.subr.mxu0 0.0
        %958 = vmatpush1.msra.mxu0 0.0
        %959 = vmatprep.subr.mxu0 0.0
        %960 = vmatpush1.msra.mxu0 0.0
        %961 = vmatprep.subr.mxu0 0.0
        %962 = vmatpush1.msra.mxu0 0.0
        %963 = vmatprep.subr.mxu0 0.0
        %964 = vmatpush1.msra.mxu0 0.0
        %965 = vmatprep.subr.mxu0 0.0
        %966 = vmatpush1.msra.mxu0 0.0
        %967 = vmatprep.mubr.f32.mxu0 0.0
        %968 = vmatmul.mubr.f32.gmra.mrb[0].mxu0 %v877
        %v969 = vpop.f32.mrb[0].mxu0
        %v970 = vadd.f32 %v844, %v969
        %v971 = vpop.f32.mrb[0].mxu0
        %v972 = vadd.f32 %v844, %v971
        %973 = vmatprep.mubr.f32.mxu0 0.0
        %974 = vmatmul.mubr.f32.gmra.mrb[0].mxu0 %v880
        %v975 = vpop.f32.mrb[0].mxu0
        %v976 = vadd.f32 %v849, %v975
        %v977 = vpop.f32.mrb[0].mxu0
        %v978 = vadd.f32 %v849, %v977
        %979 = vmatprep.mubr.f32.mxu0 0.0
        %980 = vmatmul.mubr.f32.gmra.mrb[0].mxu0 %v883
        %v981 = vpop.f32.mrb[0].mxu0
        %v982 = vadd.f32 %v854, %v981
        %v983 = vpop.f32.mrb[0].mxu0
        %v984 = vadd.f32 %v854, %v983
        %985 = vmatprep.mubr.f32.mxu0 0.0
        %986 = vmatmul.mubr.f32.gmra.mrb[0].mxu0 %v886
        %v987 = vpop.f32.mrb[0].mxu0
        %v988 = vadd.f32 %v859, %v987
        %v989 = vpop.f32.mrb[0].mxu0
        %v990 = vadd.f32 %v859, %v989
        %991 = vmatprep.mubr.f32.mxu0 0.0
        %992 = vmatmul.mubr.f32.gmra.mrb[0].mxu0 %v889
        %v993 = vpop.f32.mrb[0].mxu0
        %v994 = vadd.f32 %v864, %v993
        %v995 = vpop.f32.mrb[0].mxu0
        %v996 = vadd.f32 %v864, %v995
        %997 = vmatprep.mubr.f32.mxu0 0.0
        %998 = vmatmul.mubr.f32.gmra.mrb[0].mxu0 %v892
        %v999 = vpop.f32.mrb[0].mxu0
        %v1000 = vadd.f32 %v869, %v999
        %v1001 = vpop.f32.mrb[0].mxu0
        %v1002 = vadd.f32 %v869, %v1001
        %1003 = vmatprep.mubr.f32.mxu0 0.0
        %1004 = vmatmul.mubr.f32.gmra.mrb[0].mxu0 %v895
        %v1005 = vpop.f32.mrb[0].mxu0
        %v1006 = vadd.f32 %v874, %v1005
        %v1007 = vpop.f32.mrb[0].mxu0
        %v1008 = vadd.f32 %v874, %v1007
        %1009 = vdwg.mxu0
        %v1010 = vtanh.pop %v970
        %v1011 = vtanh.pop %v972
        %v1012 = vtanh.pop %v976
        %v1013 = vtanh.pop %v978
        %v1014 = vtanh.pop %v982
        %v1015 = vtanh.pop %v984
        %v1016 = vtanh.pop %v988
        %v1017 = vtanh.pop %v990
        %v1018 = vtanh.pop %v994
        %v1019 = vtanh.pop %v996
        %v1020 = vtanh.pop %v1000
        %v1021 = vtanh.pop %v1002
        %v1022 = vtanh.pop %v1006
        %v1023 = vtanh.pop %v1008
        %s1024 = scalar_lea.vmem %s3, 112
        %v1025 = vld [vmem:[%s1024] sm:$0xff]
        %v1026 = vld [vmem:[%s1024 + $0x8] sm:$0xff]
        %v1027 = vld [vmem:[%s1024 + $0x10] sm:$0xff]
        %v1028 = vld [vmem:[%s1024 + $0x18] sm:$0xff]
        %v1029 = vld [vmem:[%s1024 + $0x20] sm:$0xff]
        %v1030 = vld [vmem:[%s1024 + $0x28] sm:$0xff]
        %v1031 = vld [vmem:[%s1024 + $0x30] sm:$0x3]
        %s1032 = scalar_lea.vmem %s4, 112
        %v1033 = vld [vmem:[%s1032] sm:$0xff]
        %v1034 = vld [vmem:[%s1032 + $0x8] sm:$0xff]
        %v1035 = vld [vmem:[%s1032 + $0x10] sm:$0xff]
        %v1036 = vld [vmem:[%s1032 + $0x18] sm:$0xff]
        %v1037 = vld [vmem:[%s1032 + $0x20] sm:$0xff]
        %v1038 = vld [vmem:[%s1032 + $0x28] sm:$0xff]
        %v1039 = vld [vmem:[%s1032 + $0x30] sm:$0x3]
        %1041 = vset.pattern.permute.xlu0 0
        %1042 = vperm.xlu0 %1041, %v1033
        %v1043 = vpop.permute.xlu0 %1042
        %1046 = vset.pattern.permute.xlu0 0
        %1047 = vperm.xlu0 %1046, %v1034
        %v1048 = vpop.permute.xlu0 %1047
        %1051 = vset.pattern.permute.xlu0 0
        %1052 = vperm.xlu0 %1051, %v1035
        %v1053 = vpop.permute.xlu0 %1052
        %1056 = vset.pattern.permute.xlu0 0
        %1057 = vperm.xlu0 %1056, %v1036
        %v1058 = vpop.permute.xlu0 %1057
        %1061 = vset.pattern.permute.xlu0 0
        %1062 = vperm.xlu0 %1061, %v1037
        %v1063 = vpop.permute.xlu0 %1062
        %1066 = vset.pattern.permute.xlu0 0
        %1067 = vperm.xlu0 %1066, %v1038
        %v1068 = vpop.permute.xlu0 %1067
        %1071 = vset.pattern.permute.xlu0 0
        %1072 = vperm.xlu0 %1071, %v1039
        %v1073 = vpop.permute.xlu0 %1072
        %v1076 = vsel %vm675, %v1025, 0
        %v1079 = vsel %vm675, %v1026, 0
        %v1082 = vsel %vm675, %v1027, 0
        %v1085 = vsel %vm675, %v1028, 0
        %v1088 = vsel %vm675, %v1029, 0
        %v1091 = vsel %vm675, %v1030, 0
        %v1094 = vsel %vm675, %v1031, 0
        %v1097 = vsel %vm697, %v1022, 0
        %v1100 = vsel %vm697, %v1023, 0
        %1102 = vmatprep.subr.mxu0 %v1011
        %1103 = vmatpush1.msra.mxu0 %v1010
        %1104 = vmatprep.subr.mxu0 %v1013
        %1105 = vmatpush1.msra.mxu0 %v1012
        %1106 = vmatprep.subr.mxu0 %v1015
        %1107 = vmatpush1.msra.mxu0 %v1014
        %1108 = vmatprep.subr.mxu0 %v1017
        %1109 = vmatpush1.msra.mxu0 %v1016
        %1110 = vmatprep.subr.mxu0 %v1019
        %1111 = vmatpush1.msra.mxu0 %v1018
        %1112 = vmatprep.subr.mxu0 %v1021
        %1113 = vmatpush1.msra.mxu0 %v1020
        %1114 = vmatprep.subr.mxu0 %v1100
        %1115 = vmatpush1.msra.mxu0 %v1097
        %1116 = vmatprep.subr.mxu0 0.0
        %1117 = vmatpush1.msra.mxu0 0.0
        %1118 = vmatprep.subr.mxu0 0.0
        %1119 = vmatpush1.msra.mxu0 0.0
        %1120 = vmatprep.subr.mxu0 0.0
        %1121 = vmatpush1.msra.mxu0 0.0
        %1122 = vmatprep.subr.mxu0 0.0
        %1123 = vmatpush1.msra.mxu0 0.0
        %1124 = vmatprep.subr.mxu0 0.0
        %1125 = vmatpush1.msra.mxu0 0.0
        %1126 = vmatprep.subr.mxu0 0.0
        %1127 = vmatpush1.msra.mxu0 0.0
        %1128 = vmatprep.subr.mxu0 0.0
        %1129 = vmatpush1.msra.mxu0 0.0
        %1130 = vmatprep.subr.mxu0 0.0
        %1131 = vmatpush1.msra.mxu0 0.0
        %1132 = vmatprep.subr.mxu0 0.0
        %1133 = vmatpush1.msra.mxu0 0.0
        %1134 = vmatprep.subr.mxu0 0.0
        %1135 = vmatpush1.msra.mxu0 0.0
        %1136 = vmatprep.subr.mxu0 0.0
        %1137 = vmatpush1.msra.mxu0 0.0
        %1138 = vmatprep.subr.mxu0 0.0
        %1139 = vmatpush1.msra.mxu0 0.0
        %1140 = vmatprep.subr.mxu0 0.0
        %1141 = vmatpush1.msra.mxu0 0.0
        %1142 = vmatprep.subr.mxu0 0.0
        %1143 = vmatpush1.msra.mxu0 0.0
        %1144 = vmatprep.subr.mxu0 0.0
        %1145 = vmatpush1.msra.mxu0 0.0
        %1146 = vmatprep.subr.mxu0 0.0
        %1147 = vmatpush1.msra.mxu0 0.0
        %1148 = vmatprep.subr.mxu0 0.0
        %1149 = vmatpush1.msra.mxu0 0.0
        %1150 = vmatprep.subr.mxu0 0.0
        %1151 = vmatpush1.msra.mxu0 0.0
        %1152 = vmatprep.subr.mxu0 0.0
        %1153 = vmatpush1.msra.mxu0 0.0
        %1154 = vmatprep.subr.mxu0 0.0
        %1155 = vmatpush1.msra.mxu0 0.0
        %1156 = vmatprep.subr.mxu0 0.0
        %1157 = vmatpush1.msra.mxu0 0.0
        %1158 = vmatprep.subr.mxu0 0.0
        %1159 = vmatpush1.msra.mxu0 0.0
        %1160 = vmatprep.subr.mxu0 0.0
        %1161 = vmatpush1.msra.mxu0 0.0
        %1162 = vmatprep.subr.mxu0 0.0
        %1163 = vmatpush1.msra.mxu0 0.0
        %1164 = vmatprep.subr.mxu0 0.0
        %1165 = vmatpush1.msra.mxu0 0.0
        %1166 = vmatprep.mubr.f32.mxu0 0.0
        %1167 = vmatmul.mubr.f32.gmra.mrb[0].mxu0 %v1076
        %v1168 = vpop.f32.mrb[0].mxu0
        %v1169 = vadd.f32 %v1043, %v1168
        %v1170 = vpop.f32.mrb[0].mxu0
        %v1171 = vadd.f32 %v1043, %v1170
        %1172 = vmatprep.mubr.f32.mxu0 0.0
        %1173 = vmatmul.mubr.f32.gmra.mrb[0].mxu0 %v1079
        %v1174 = vpop.f32.mrb[0].mxu0
        %v1175 = vadd.f32 %v1048, %v1174
        %v1176 = vpop.f32.mrb[0].mxu0
        %v1177 = vadd.f32 %v1048, %v1176
        %1178 = vmatprep.mubr.f32.mxu0 0.0
        %1179 = vmatmul.mubr.f32.gmra.mrb[0].mxu0 %v1082
        %v1180 = vpop.f32.mrb[0].mxu0
        %v1181 = vadd.f32 %v1053, %v1180
        %v1182 = vpop.f32.mrb[0].mxu0
        %v1183 = vadd.f32 %v1053, %v1182
        %1184 = vmatprep.mubr.f32.mxu0 0.0
        %1185 = vmatmul.mubr.f32.gmra.mrb[0].mxu0 %v1085
        %v1186 = vpop.f32.mrb[0].mxu0
        %v1187 = vadd.f32 %v1058, %v1186
        %v1188 = vpop.f32.mrb[0].mxu0
        %v1189 = vadd.f32 %v1058, %v1188
        %1190 = vmatprep.mubr.f32.mxu0 0.0
        %1191 = vmatmul.mubr.f32.gmra.mrb[0].mxu0 %v1088
        %v1192 = vpop.f32.mrb[0].mxu0
        %v1193 = vadd.f32 %v1063, %v1192
        %v1194 = vpop.f32.mrb[0].mxu0
        %v1195 = vadd.f32 %v1063, %v1194
        %1196 = vmatprep.mubr.f32.mxu0 0.0
        %1197 = vmatmul.mubr.f32.gmra.mrb[0].mxu0 %v1091
        %v1198 = vpop.f32.mrb[0].mxu0
        %v1199 = vadd.f32 %v1068, %v1198
        %v1200 = vpop.f32.mrb[0].mxu0
        %v1201 = vadd.f32 %v1068, %v1200
        %1202 = vmatprep.mubr.f32.mxu0 0.0
        %1203 = vmatmul.mubr.f32.gmra.mrb[0].mxu0 %v1094
        %v1204 = vpop.f32.mrb[0].mxu0
        %v1205 = vadd.f32 %v1073, %v1204
        %v1206 = vpop.f32.mrb[0].mxu0
        %v1207 = vadd.f32 %v1073, %v1206
        %1208 = vdwg.mxu0
        %v1209 = vtanh.pop %v1169
        %v1210 = vtanh.pop %v1171
        %v1211 = vtanh.pop %v1175
        %v1212 = vtanh.pop %v1177
        %v1213 = vtanh.pop %v1181
        %v1214 = vtanh.pop %v1183
        %v1215 = vtanh.pop %v1187
        %v1216 = vtanh.pop %v1189
        %v1217 = vtanh.pop %v1193
        %v1218 = vtanh.pop %v1195
        %v1219 = vtanh.pop %v1199
        %v1220 = vtanh.pop %v1201
        %v1221 = vtanh.pop %v1205
        %v1222 = vtanh.pop %v1207
        %v1223 = vld [vmem:[%s5] sm:$0x1]
        %v1224 = vld [vmem:[#allocation2] sm:$0x1]
        %1226 = vset.pattern.permute.xlu0 0
        %1227 = vperm.xlu0 %1226, %v1224
        %v1228 = vpop.permute.xlu0 %1227
        %v1230 = vlaneseq
        %v1231 = vshrl.u32 %v1230, 7
        %v1232 = vsub.s32 0, %v1231
        %v1233 = vrot.slane %v1228, %v1232
        %v1235 = vsel %vm675, %v1223, 0
        %v1238 = vsel %vm697, %v1221, 0
        %v1241 = vsel %vm697, %v1222, 0
        %1243 = vmatprep.subr.mxu0 %v1210
        %1244 = vmatpush1.msra.mxu0 %v1209
        %1245 = vmatprep.subr.mxu0 %v1212
        %1246 = vmatpush1.msra.mxu0 %v1211
        %1247 = vmatprep.subr.mxu0 %v1214
        %1248 = vmatpush1.msra.mxu0 %v1213
        %1249 = vmatprep.subr.mxu0 %v1216
        %1250 = vmatpush1.msra.mxu0 %v1215
        %1251 = vmatprep.subr.mxu0 %v1218
        %1252 = vmatpush1.msra.mxu0 %v1217
        %1253 = vmatprep.subr.mxu0 %v1220
        %1254 = vmatpush1.msra.mxu0 %v1219
        %1255 = vmatprep.subr.mxu0 %v1241
        %1256 = vmatpush1.msra.mxu0 %v1238
        %1257 = vmatprep.subr.mxu0 0.0
        %1258 = vmatpush1.msra.mxu0 0.0
        %1259 = vmatprep.subr.mxu0 0.0
        %1260 = vmatpush1.msra.mxu0 0.0
        %1261 = vmatprep.subr.mxu0 0.0
        %1262 = vmatpush1.msra.mxu0 0.0
        %1263 = vmatprep.subr.mxu0 0.0
        %1264 = vmatpush1.msra.mxu0 0.0
        %1265 = vmatprep.subr.mxu0 0.0
        %1266 = vmatpush1.msra.mxu0 0.0
        %1267 = vmatprep.subr.mxu0 0.0
        %1268 = vmatpush1.msra.mxu0 0.0
        %1269 = vmatprep.subr.mxu0 0.0
        %1270 = vmatpush1.msra.mxu0 0.0
        %1271 = vmatprep.subr.mxu0 0.0
        %1272 = vmatpush1.msra.mxu0 0.0
        %1273 = vmatprep.subr.mxu0 0.0
        %1274 = vmatpush1.msra.mxu0 0.0
        %1275 = vmatprep.subr.mxu0 0.0
        %1276 = vmatpush1.msra.mxu0 0.0
        %1277 = vmatprep.subr.mxu0 0.0
        %1278 = vmatpush1.msra.mxu0 0.0
        %1279 = vmatprep.subr.mxu0 0.0
        %1280 = vmatpush1.msra.mxu0 0.0
        %1281 = vmatprep.subr.mxu0 0.0
        %1282 = vmatpush1.msra.mxu0 0.0
        %1283 = vmatprep.subr.mxu0 0.0
        %1284 = vmatpush1.msra.mxu0 0.0
        %1285 = vmatprep.subr.mxu0 0.0
        %1286 = vmatpush1.msra.mxu0 0.0
        %1287 = vmatprep.subr.mxu0 0.0
        %1288 = vmatpush1.msra.mxu0 0.0
        %1289 = vmatprep.subr.mxu0 0.0
        %1290 = vmatpush1.msra.mxu0 0.0
        %1291 = vmatprep.subr.mxu0 0.0
        %1292 = vmatpush1.msra.mxu0 0.0
        %1293 = vmatprep.subr.mxu0 0.0
        %1294 = vmatpush1.msra.mxu0 0.0
        %1295 = vmatprep.subr.mxu0 0.0
        %1296 = vmatpush1.msra.mxu0 0.0
        %1297 = vmatprep.subr.mxu0 0.0
        %1298 = vmatpush1.msra.mxu0 0.0
        %1299 = vmatprep.subr.mxu0 0.0
        %1300 = vmatpush1.msra.mxu0 0.0
        %1301 = vmatprep.subr.mxu0 0.0
        %1302 = vmatpush1.msra.mxu0 0.0
        %1303 = vmatprep.subr.mxu0 0.0
        %1304 = vmatpush1.msra.mxu0 0.0
        %1305 = vmatprep.subr.mxu0 0.0
        %1306 = vmatpush1.msra.mxu0 0.0
        %1307 = vmatprep.mubr.f32.mxu0 0.0
        %1308 = vmatmul.mubr.f32.gmra.mrb[0].mxu0 %v1235
        %v1309 = vpop.f32.mrb[0].mxu0
        %v1310 = vadd.f32 %v1233, %v1309
        %v1311 = vpop.f32.mrb[0].mxu0
        %v1312 = vadd.f32 %v1233, %v1311
        %1313 = vdwg.mxu0
        %v1316 = vcombine.low %v1310, %v1312
        %v1318 = vunpack.c.l.s4 1966171168
        %v1319 = vunpack.c.0.s8 %v1318
        %v1320 = vlaneseq
        %v1321 = vshrl.u32 %v1320, 7
        %v1322 = vsub.s32 %v1319, %v1321
        %v1323 = vrot.slane %v1316, %v1322
        %v1325 = vunpack.c.l.s4 1966171168
        %v1326 = vunpack.c.0.s8 %v1325
        %v1327 = vlaneseq
        %v1328 = vshrl.u32 %v1327, 7
        %v1329 = vsub.s32 %v1326, %v1328
        %v1330 = vrot.slane %v1323, %v1329
        %v1332 = vlaneseq
        %vm1333 = vcmp.ge.s32.totalorder %v1332, 0
        %vm1334 = vcmp.lt.s32.totalorder %v1332, 256
        %vm1335 = vmand %vm1333, %vm1334
        %1336 = vst.msk [vmem:[%s286] sm:$0x3] %vm1335, %v1330
        %s1337 = sand.u32 %s183, 1
        %s1338 = scalar_lea.sflag [#allocation4], %s1337
        %s1339 = sand.u32 %s183, 1
        %s1340 = smul.addr %s1339, 2
        %s1341 = scalar_lea.vmem [#allocation3], %s1340
        // Predicated region
        $region49: #{feedforward.1} parent=47 // pred_check
          %p1342 = pneg %p193
        $region50: #{feedforward.1} parent=47 // pred_check_branch
          %1344 = sbr.rel (%p1342) target = $region52
        $region51: #{feedforward.1} parent=47 // pred_region
          %s1345 = smul.u32 2, %s23
          %s1346 = ssub.s32 3, %s1345
          %p1347 = scmp.lt.s32.totalorder %s1346, 2
          %s1348 = scalar_select %p1347, %s1346, 2
          %s1349 = smul.u32 16, %s1348
          %s1351 = ssub.s32 32, %s1349
          %1352 = vsyncadd %s1338, %s1351
          %p1353 = scmp.ne.s32.totalorder 0, %s1349
          %s1354 = smul.addr %s1345, 16
          %s1355 = scalar_lea.hbm %s7, %s1354
          %s1356 = sshll.u32 %s1348, 4
          %s1357 = sshll.u32 %s1341, 4
          %s1358 = int_to_ptr.vmem [resolvable:$true] %s1357
          %1360 = dma.vmem_to_hbm [thread:$0]  (%p1353), %s1358, %s1356, %s1355, %s1338
        $region52: #{feedforward.1} parent=47 // pred_fallthru
          _
      $region48: #{feedforward.1} parent=5 // pred_fallthru
        _
      %p1361 = scmp.le.s32.totalorder 2, %s18
      // Predicated region
      $region53: #{feedforward.1} parent=5 // pred_check
        %p1362 = pneg %p1361
      $region54: #{feedforward.1} parent=5 // pred_check_branch
        %1364 = sbr.rel (%p1362) target = $region56
      $region55: #{feedforward.1} parent=5 // pred_region
        %s1365 = ssub.s32 %s18, 2
        // Predicated region
        $region57: #{feedforward.1} parent=55 // pred_check
          %p1366 = pneg %p199
        $region58: #{feedforward.1} parent=55 // pred_check_branch
          %1368 = sbr.rel (%p1366) target = $region60
        $region59: #{feedforward.1} parent=55 // pred_region
          %s1369 = sand.u32 %s184, 1
          %s1370 = scalar_lea.sflag [#allocation4], %s1369
          %s1371 = sand.u32 %s184, 1
          %s1372 = smul.addr %s1371, 2
          %s1373 = scalar_lea.vmem [#allocation3], %s1372
          %1374 = dma.done %s1370, 32
        $region60: #{feedforward.1} parent=55 // pred_fallthru
          _
      $region56: #{feedforward.1} parent=5 // pred_fallthru
        _
    $region6: #{feedforward.1} parent=1 // loop_footer
      %s22 = sadd.s32 1, %s18
    $region7: #{feedforward.1} parent=1 // loop_footer_branch
      %17 = sbr.rel target = $region3
    $region8: #{feedforward.1} parent=1 // loop_exit
      _
    %1375 = vsyncpa [#allocation4], 1
    %s1376 = scalar_lea.sflag [#allocation4], 1
    %1377 = vsyncpa %s1376, 1

</llo_original>
